<compile_context>
chip_gen: v5e
topology: v5e:2x2
jax: 0.10.0
libtpu: 0.0.40
codegen_flags: <defaults>
</compile_context>

<pallas_src>
import functools

import jax
import jax.numpy as jnp
from jax import lax
from jax.experimental import pallas as pl
from jax.experimental.pallas import tpu as pltpu


def _comment_classifier_kernel(seq_ref, wa_ref, wm_ref, b_ref, out_ref,
                               sum_acc, max_acc, *, t_total, t_tile, needs_mask):
    t = pl.program_id(1)

    @pl.when(t == 0)
    def _init():
        sum_acc[...] = jnp.zeros_like(sum_acc)
        max_acc[...] = jnp.full_like(max_acc, -jnp.inf)

    # (Bt, Tt, F) tile; widen once so a bf16-streamed input would still
    # accumulate in f32.
    seq = seq_ref[...].astype(jnp.float32)

    if needs_mask:
        # Mask rows past the true T on the (possibly partial) last tile.
        row = t * t_tile + lax.broadcasted_iota(jnp.int32, (t_tile, 1), 0)
        valid = row < t_total                      # (Tt, 1) broadcasts over (Bt, Tt, F)
        seq_sum = jnp.where(valid, seq, 0.0)
        seq_max = jnp.where(valid, seq, -jnp.inf)
    else:
        seq_sum = seq
        seq_max = seq

    sum_acc[...] += jnp.sum(seq_sum, axis=1)                         # (Bt, F)
    max_acc[...] = jnp.maximum(max_acc[...], jnp.max(seq_max, axis=1))

    @pl.when(t == pl.num_programs(1) - 1)
    def _finalize():
        # TODO(synk): nn.Dropout(0.1) is identity at inference; no kernel op emitted.
        avg = sum_acc[...] * jnp.float32(1.0 / t_total)
        out = jnp.dot(avg, wa_ref[...], preferred_element_type=jnp.float32)
        out = out + jnp.dot(max_acc[...], wm_ref[...],
                            preferred_element_type=jnp.float32)
        out_ref[...] = (out + b_ref[...]).astype(out_ref.dtype)


def comment_classifier(seq, weight, bias, *, bt=None, tt=None):
    """seq: (B, T, 2*hidden); weight: (output_dim, 4*hidden); bias: (output_dim,)."""
    B, T, F = seq.shape
    O = weight.shape[0]
    assert weight.shape[1] == 2 * F, "fc_out expects concat(avg, max) features"

    # ---- tile sizes (respect the (8,128) layout rule on the last two block dims) ----
    if tt is None:
        tt = T if T <= 512 else 512               # 512 is a multiple of 8
    if bt is None:
        bt = min(B, 128) if B % 8 == 0 else B     # full-dim block is always legal

    nb = pl.cdiv(B, bt)
    nt = pl.cdiv(T, tt)
    needs_mask = (T % tt) != 0

    # ---- lane-dense, pre-split params (one-time prep; hoistable out of hot loop) ----
    O_pad = ((O + 127) // 128) * 128
    O_pad = max(O_pad, 128)
    wt = weight.T.astype(jnp.float32)                                  # (2F, O)
    wa = jnp.zeros((F, O_pad), jnp.float32).at[:, :O].set(wt[:F])      # avg half
    wm = jnp.zeros((F, O_pad), jnp.float32).at[:, :O].set(wt[F:])      # max half
    b2d = jnp.zeros((1, O_pad), jnp.float32).at[0, :O].set(bias.astype(jnp.float32))

    # ---- VMEM budget: 2x double-buffered seq block + params + accs + out ----
    seq_blk = bt * tt * F * seq.dtype.itemsize
    param_bytes = (2 * F * O_pad + O_pad) * 4
    acc_bytes = 2 * bt * F * 4
    out_bytes = bt * O_pad * 4
    vmem_limit = min(2 * (2 * seq_blk + param_bytes + acc_bytes + 2 * out_bytes)
                     + (2 << 20), 64 << 20)

    kernel = functools.partial(_comment_classifier_kernel,
                               t_total=T, t_tile=tt, needs_mask=needs_mask)

    flops = 2 * B * T * F + 4 * B * F * O_pad
    bytes_accessed = B * T * F * seq.dtype.itemsize + param_bytes + B * O_pad * 4

    out_padded = pl.pallas_call(
        kernel,
        out_shape=jax.ShapeDtypeStruct((B, O_pad), jnp.float32),
        grid_spec=pltpu.PrefetchScalarGridSpec(
            num_scalar_prefetch=0,
            grid=(nb, nt),                                   # reduction axis last
            in_specs=[
                pl.BlockSpec((bt, tt, F), lambda b, t: (b, t, 0)),   # streamed seq
                pl.BlockSpec((F, O_pad), lambda b, t: (0, 0)),       # Wt_avg (invariant)
                pl.BlockSpec((F, O_pad), lambda b, t: (0, 0)),       # Wt_max (invariant)
                pl.BlockSpec((1, O_pad), lambda b, t: (0, 0)),       # bias   (invariant)
            ],
            out_specs=pl.BlockSpec((bt, O_pad), lambda b, t: (b, 0)),
            scratch_shapes=[pltpu.VMEM((bt, F), jnp.float32),        # sum accumulator
                            pltpu.VMEM((bt, F), jnp.float32)],       # max accumulator
        ),
        compiler_params=pltpu.CompilerParams(
            dimension_semantics=("parallel", "arbitrary"),
            vmem_limit_bytes=int(vmem_limit),
        ),
        cost_estimate=pl.CostEstimate(flops=int(flops), transcendentals=0,
                                      bytes_accessed=int(bytes_accessed)),
    )(seq, wa, wm, b2d)

    return out_padded[:, :O]


if __name__ == "__main__":
    # Small shapes consistent with the module:
    #   hidden_dim=32 -> seq feature dim = 2*hidden = 64, fc_in = 4*hidden = 128
    B, T, hidden_dim, output_dim = 2, 8, 32, 6
    F = 2 * hidden_dim

    key = jax.random.PRNGKey(0)
    k_seq, k_w, k_b = jax.random.split(key, 3)
    seq = jax.random.normal(k_seq, (B, T, F), dtype=jnp.float32)
    # Deterministic "Linear" params (synthetic, not a checkpoint load).
    weight = jax.random.normal(k_w, (output_dim, 4 * hidden_dim), dtype=jnp.float32) * 0.05
    bias = jax.random.normal(k_b, (output_dim,), dtype=jnp.float32) * 0.05

    out = comment_classifier(seq, weight, bias)
    out = jax.block_until_ready(out)

    # Pure-JAX reference for a sanity check.
    avg_ref = jnp.mean(seq, axis=1)
    max_ref = jnp.max(seq, axis=1)
    ref = jnp.concatenate([avg_ref, max_ref], 1) @ weight.T + bias
    assert out.shape == (B, output_dim)
    assert jnp.allclose(out, ref, atol=1e-5, rtol=1e-5), "mismatch vs reference"

    print("KERNEL_OK")
</pallas_src>

<mosaic_0001>
module attributes {stable_mosaic.version = 11 : i64} {
  func.func @_comment_classifier_kernel(%arg0: i32, %arg1: i32, %arg2: memref<2x8x64xf32, #tpu.memory_space<vmem>>, %arg3: memref<64x128xf32, #tpu.memory_space<vmem>>, %arg4: memref<64x128xf32, #tpu.memory_space<vmem>>, %arg5: memref<1x128xf32, #tpu.memory_space<vmem>>, %arg6: memref<2x128xf32, #tpu.memory_space<vmem>>, %arg7: memref<2x64xf32, #tpu.memory_space<vmem>>, %arg8: memref<2x64xf32, #tpu.memory_space<vmem>>) attributes {dimension_semantics = [#tpu.dimension_semantics<parallel>, #tpu.dimension_semantics<arbitrary>], iteration_bounds = array<i64: 1, 1>, scalar_prefetch = 0 : i64, scratch_operands = 2 : i64, tpu.core_type = #tpu.core_type<tc>, window_params = [{transform_indices = @transform_0, window_bounds = array<i64: 2, 8, 64>}, {pipeline_mode = #tpu.pipeline_mode<synchronous>, transform_indices = @transform_1, window_bounds = array<i64: 64, 128>}, {pipeline_mode = #tpu.pipeline_mode<synchronous>, transform_indices = @transform_2, window_bounds = array<i64: 64, 128>}, {pipeline_mode = #tpu.pipeline_mode<synchronous>, transform_indices = @transform_3, window_bounds = array<i64: 1, 128>}, {transform_indices = @transform_4, window_bounds = array<i64: 2, 128>}]} {
    %c0_i32 = arith.constant 0 : i32
    %0 = arith.cmpi eq, %arg1, %c0_i32 : i32
    %1 = arith.extui %0 : i1 to i32
    %c0_i32_0 = arith.constant 0 : i32
    %2 = arith.cmpi ne, %1, %c0_i32_0 : i32
    scf.if %2 {
      %cst_14 = arith.constant 0.000000e+00 : f32
      %15 = vector.broadcast %cst_14 : f32 to vector<2x64xf32>
      %c0_15 = arith.constant 0 : index
      %c0_16 = arith.constant 0 : index
      %16 = vector.load %arg7[%c0_15, %c0_16] : memref<2x64xf32, #tpu.memory_space<vmem>>, vector<2x64xf32>
      tpu.vector_store %arg7[%c0_15, %c0_16], %15 {strides = array<i32>} : memref<2x64xf32, #tpu.memory_space<vmem>>, vector<2x64xf32>,
      %cst_17 = arith.constant 0xFF800000 : f32
      %17 = vector.broadcast %cst_17 : f32 to vector<2x64xf32>
      %c0_18 = arith.constant 0 : index
      %c0_19 = arith.constant 0 : index
      %18 = vector.load %arg8[%c0_18, %c0_19] : memref<2x64xf32, #tpu.memory_space<vmem>>, vector<2x64xf32>
      tpu.vector_store %arg8[%c0_18, %c0_19], %17 {strides = array<i32>} : memref<2x64xf32, #tpu.memory_space<vmem>>, vector<2x64xf32>,
    } else {
    }
    %c0 = arith.constant 0 : index
    %c0_1 = arith.constant 0 : index
    %c0_2 = arith.constant 0 : index
    %3 = vector.load %arg2[%c0, %c0_1, %c0_2] : memref<2x8x64xf32, #tpu.memory_space<vmem>>, vector<2x8x64xf32>
    %c0_3 = arith.constant 0 : index
    %c0_4 = arith.constant 0 : index
    %4 = vector.load %arg7[%c0_3, %c0_4] : memref<2x64xf32, #tpu.memory_space<vmem>>, vector<2x64xf32>
    %cst = arith.constant dense<0.000000e+00> : vector<2x64xf32>
    %5 = vector.multi_reduction <add>, %3, %cst [1] : vector<2x8x64xf32> to vector<2x64xf32>
    %6 = arith.addf %4, %5 : vector<2x64xf32>
    %c0_5 = arith.constant 0 : index
    %c0_6 = arith.constant 0 : index
    %7 = vector.load %arg7[%c0_5, %c0_6] : memref<2x64xf32, #tpu.memory_space<vmem>>, vector<2x64xf32>
    tpu.vector_store %arg7[%c0_5, %c0_6], %6 {strides = array<i32>} : memref<2x64xf32, #tpu.memory_space<vmem>>, vector<2x64xf32>,
    %c0_7 = arith.constant 0 : index
    %c0_8 = arith.constant 0 : index
    %8 = vector.load %arg8[%c0_7, %c0_8] : memref<2x64xf32, #tpu.memory_space<vmem>>, vector<2x64xf32>
    %cst_9 = arith.constant dense<0xFF800000> : vector<2x64xf32>
    %9 = vector.multi_reduction <maximumf>, %3, %cst_9 [1] : vector<2x8x64xf32> to vector<2x64xf32>
    %10 = arith.maximumf %8, %9 : vector<2x64xf32>
    %c0_10 = arith.constant 0 : index
    %c0_11 = arith.constant 0 : index
    %11 = vector.load %arg8[%c0_10, %c0_11] : memref<2x64xf32, #tpu.memory_space<vmem>>, vector<2x64xf32>
    tpu.vector_store %arg8[%c0_10, %c0_11], %10 {strides = array<i32>} : memref<2x64xf32, #tpu.memory_space<vmem>>, vector<2x64xf32>,
    %c0_i32_12 = arith.constant 0 : i32
    %12 = arith.cmpi eq, %arg1, %c0_i32_12 : i32
    %13 = arith.extui %12 : i1 to i32
    %c0_i32_13 = arith.constant 0 : i32
    %14 = arith.cmpi ne, %13, %c0_i32_13 : i32
    scf.if %14 {
      %c0_14 = arith.constant 0 : index
      %c0_15 = arith.constant 0 : index
      %15 = vector.load %arg7[%c0_14, %c0_15] : memref<2x64xf32, #tpu.memory_space<vmem>>, vector<2x64xf32>
      %cst_16 = arith.constant 1.250000e-01 : f32
      %16 = vector.broadcast %cst_16 : f32 to vector<2x64xf32>
      %17 = arith.mulf %15, %16 : vector<2x64xf32>
      %c0_17 = arith.constant 0 : index
      %c0_18 = arith.constant 0 : index
      %18 = vector.load %arg3[%c0_17, %c0_18] : memref<64x128xf32, #tpu.memory_space<vmem>>, vector<64x128xf32>
      %cst_19 = arith.constant dense<0.000000e+00> : vector<2x128xf32>
      %19 = tpu.matmul %17, %18, %cst_19 {dimension_numbers = #tpu.dot_dimension_numbers<[1], [0], [0], [1], [0, 0, 1, 1], [], []>} : vector<2x64xf32>, vector<64x128xf32>, vector<2x128xf32> -> vector<2x128xf32>
      %c0_20 = arith.constant 0 : index
      %c0_21 = arith.constant 0 : index
      %20 = vector.load %arg8[%c0_20, %c0_21] : memref<2x64xf32, #tpu.memory_space<vmem>>, vector<2x64xf32>
      %c0_22 = arith.constant 0 : index
      %c0_23 = arith.constant 0 : index
      %21 = vector.load %arg4[%c0_22, %c0_23] : memref<64x128xf32, #tpu.memory_space<vmem>>, vector<64x128xf32>
      %cst_24 = arith.constant dense<0.000000e+00> : vector<2x128xf32>
      %22 = tpu.matmul %20, %21, %cst_24 {dimension_numbers = #tpu.dot_dimension_numbers<[1], [0], [0], [1], [0, 0, 1, 1], [], []>} : vector<2x64xf32>, vector<64x128xf32>, vector<2x128xf32> -> vector<2x128xf32>
      %23 = arith.addf %19, %22 : vector<2x128xf32>
      %c0_25 = arith.constant 0 : index
      %c0_26 = arith.constant 0 : index
      %24 = vector.load %arg5[%c0_25, %c0_26] : memref<1x128xf32, #tpu.memory_space<vmem>>, vector<1x128xf32>
      %25 = vector.broadcast %24 : vector<1x128xf32> to vector<2x128xf32>
      %26 = arith.addf %23, %25 : vector<2x128xf32>
      %c0_27 = arith.constant 0 : index
      %c0_28 = arith.constant 0 : index
      %27 = vector.load %arg6[%c0_27, %c0_28] : memref<2x128xf32, #tpu.memory_space<vmem>>, vector<2x128xf32>
      tpu.vector_store %arg6[%c0_27, %c0_28], %26 {strides = array<i32>} : memref<2x128xf32, #tpu.memory_space<vmem>>, vector<2x128xf32>,
    } else {
    }
    return
  }
  func.func @transform_0(%arg0: i32, %arg1: i32) -> (i32, i32, i32) {
    %c0_i32 = arith.constant 0 : i32
    %c0_i32_0 = arith.constant 0 : i32
    return %arg0, %arg1, %c0_i32 : i32, i32, i32
  }
  func.func @transform_1(%arg0: i32, %arg1: i32) -> (i32, i32) {
    %c0_i32 = arith.constant 0 : i32
    %c0_i32_0 = arith.constant 0 : i32
    %c0_i32_1 = arith.constant 0 : i32
    return %c0_i32, %c0_i32_0 : i32, i32
  }
  func.func @transform_2(%arg0: i32, %arg1: i32) -> (i32, i32) {
    %c0_i32 = arith.constant 0 : i32
    %c0_i32_0 = arith.constant 0 : i32
    %c0_i32_1 = arith.constant 0 : i32
    return %c0_i32, %c0_i32_0 : i32, i32
  }
  func.func @transform_3(%arg0: i32, %arg1: i32) -> (i32, i32) {
    %c0_i32 = arith.constant 0 : i32
    %c0_i32_0 = arith.constant 0 : i32
    %c0_i32_1 = arith.constant 0 : i32
    return %c0_i32, %c0_i32_0 : i32, i32
  }
  func.func @transform_4(%arg0: i32, %arg1: i32) -> (i32, i32) {
    %c0_i32 = arith.constant 0 : i32
    %c0_i32_0 = arith.constant 0 : i32
    return %arg0, %c0_i32 : i32, i32
  }
}

</mosaic_0001>

<llo_original>
// kernel: tpu_custom_call.1
$region0: #{tpu_custom_call.1}
  #allocation0 [shape = 'u32[]', space=smem, size = 0x4, offset = 0x4, fixed_abs, tag = 'smem constant byte address 0x4 - core index']
  #allocation1 [shape = 'u32[72,128]{1,0:T(1,128)}', space=vmem, size = 0x9000, scoped, tag = 'internal scratch']
  #allocation2 [shape = 'f32[2,64]{1,0:T(2,128)}', space=vmem, size = 0x400, scoped, tag = 'scratch operand']
  #allocation3 [shape = 'f32[2,64]{1,0:T(2,128)}', space=vmem, size = 0x400, scoped, tag = 'scratch operand']
  %s0 = inlined_call_operand.hbm [shape: f32[2,8,64], index: 0, kind: input, shape index: {}]
  %s1 = inlined_call_operand.hbm [shape: f32[64,128], index: 1, kind: input, shape index: {}]
  %s2 = inlined_call_operand.hbm [shape: f32[64,128], index: 2, kind: input, shape index: {}]
  %s3 = inlined_call_operand.vmem [shape: f32[1,128], index: 3, kind: input, shape index: {}]
  %s4 = inlined_call_operand.hbm [shape: f32[2,128], index: 4, kind: output, shape index: {}]
  %s5 = sld [smem:[#allocation0]]
  $region46: #{tpu_custom_call.1} parent=0
    _
  %s7 = ssub.s32 1, %s5
  %s8 = scalar_select 0, %s7, %s5
  $region1: #{tpu_custom_call.1} parent=0
    #allocation4 [shape = 'u8[8192]{0}', space=vmem, size = 0x2000, scoped, tag = 'input window, operand 0, single buffered']
    #allocation5 [shape = 's32[1]{0}', space=sflag, size = 0x4, scoped, tag = 'scoped memory for tpu_custom_call.1']
    #allocation6 [shape = 's32[1]{0}', space=sflag, size = 0x4, scoped, tag = 'scoped memory for tpu_custom_call.1']
    #allocation7 [shape = 'u8[32768]{0}', space=vmem, size = 0x8000, scoped, tag = 'input window, operand 1, single buffered']
    #allocation8 [shape = 's32[1]{0}', space=sflag, size = 0x4, scoped, tag = 'scoped memory for tpu_custom_call.1']
    #allocation9 [shape = 'u8[32768]{0}', space=vmem, size = 0x8000, scoped, tag = 'input window, operand 2, single buffered']
    #allocation10 [shape = 'u8[1024]{0}', space=vmem, size = 0x400, scoped, tag = 'output window, operand 0, single buffered']
    %9 = vsyncpa [#allocation5], 0
    %10 = vsyncpa [#allocation8], 0
    %11 = vsyncpa [#allocation6], 0
    // Predicated region
    $region2: #{tpu_custom_call.1} parent=1 // pred_check
      _
    $region3: #{tpu_custom_call.1} parent=1 // pred_check_branch
      %13 = sbr.rel (0) target = $region5
    $region4: #{tpu_custom_call.1} parent=1 // pred_region
      %15 = vsyncadd [#allocation5], 0
      %s16 = sshll.u32 %s0, 4
      %s17 = int_to_ptr.hbm [resolvable:$true] %s16
      %s18 = sshll.u32 [#allocation4], 4
      %s19 = int_to_ptr.vmem [resolvable:$true] %s18
      %24 = dma.hbm_to_vmem [thread:$0]  %s17, 256, %s19, [#allocation5], 128, 128, 8
    $region5: #{tpu_custom_call.1} parent=1 // pred_fallthru
      _
    // Predicated region
    $region6: #{tpu_custom_call.1} parent=1 // pred_check
      _
    $region7: #{tpu_custom_call.1} parent=1 // pred_check_branch
      %26 = sbr.rel (0) target = $region9
    $region8: #{tpu_custom_call.1} parent=1 // pred_region
      %28 = vsyncadd [#allocation8], 0
      %s29 = sshll.u32 %s1, 4
      %s30 = int_to_ptr.hbm [resolvable:$true] %s29
      %s31 = sshll.u32 [#allocation7], 4
      %s32 = int_to_ptr.vmem [resolvable:$true] %s31
      %37 = dma.hbm_to_vmem [thread:$0]  %s30, 1024, %s32, [#allocation8], 128, 128, 8
    $region9: #{tpu_custom_call.1} parent=1 // pred_fallthru
      _
    // Predicated region
    $region10: #{tpu_custom_call.1} parent=1 // pred_check
      _
    $region11: #{tpu_custom_call.1} parent=1 // pred_check_branch
      %39 = sbr.rel (0) target = $region13
    $region12: #{tpu_custom_call.1} parent=1 // pred_region
      %41 = vsyncadd [#allocation8], 0
      %s42 = sshll.u32 %s2, 4
      %s43 = int_to_ptr.hbm [resolvable:$true] %s42
      %s44 = sshll.u32 [#allocation9], 4
      %s45 = int_to_ptr.vmem [resolvable:$true] %s44
      %50 = dma.hbm_to_vmem [thread:$0]  %s43, 1024, %s45, [#allocation8], 128, 128, 8
    $region13: #{tpu_custom_call.1} parent=1 // pred_fallthru
      _
    // Predicated region
    $region14: #{tpu_custom_call.1} parent=1 // pred_check
      _
    $region15: #{tpu_custom_call.1} parent=1 // pred_check_branch
      %52 = sbr.rel (0) target = $region17
    $region16: #{tpu_custom_call.1} parent=1 // pred_region
      _
    $region17: #{tpu_custom_call.1} parent=1 // pred_fallthru
      _
    // Predicated region
    $region18: #{tpu_custom_call.1} parent=1 // pred_check
      _
    $region19: #{tpu_custom_call.1} parent=1 // pred_check_branch
      %54 = sbr.rel (0) target = $region21
    $region20: #{tpu_custom_call.1} parent=1 // pred_region
      %56 = dma.done [#allocation5], 256
    $region21: #{tpu_custom_call.1} parent=1 // pred_fallthru
      _
    // Predicated region
    $region22: #{tpu_custom_call.1} parent=1 // pred_check
      _
    $region23: #{tpu_custom_call.1} parent=1 // pred_check_branch
      %58 = sbr.rel (0) target = $region25
    $region24: #{tpu_custom_call.1} parent=1 // pred_region
      %60 = dma.done [#allocation8], 1024
    $region25: #{tpu_custom_call.1} parent=1 // pred_fallthru
      _
    // Predicated region
    $region26: #{tpu_custom_call.1} parent=1 // pred_check
      _
    $region27: #{tpu_custom_call.1} parent=1 // pred_check_branch
      %62 = sbr.rel (0) target = $region29
    $region28: #{tpu_custom_call.1} parent=1 // pred_region
      %64 = dma.done [#allocation8], 1024
    $region29: #{tpu_custom_call.1} parent=1 // pred_fallthru
      _
    %p65 = scmp.eq.s32.totalorder 0, 0
    // Predicated region
    $region30: #{tpu_custom_call.1} parent=1 // pred_check
      %p66 = pneg %p65
    $region31: #{tpu_custom_call.1} parent=1 // pred_check_branch
      %68 = sbr.rel (%p66) target = $region33
    $region32: #{tpu_custom_call.1} parent=1 // pred_region
      %vm69 = vcmask 517120
      %70 = vst.msk [vmem:[#allocation2] sm:$0x3] %vm69, 0.0
      %71 = vst.msk [vmem:[#allocation3] sm:$0x3] %vm69, -inf
    $region33: #{tpu_custom_call.1} parent=1 // pred_fallthru
      _
    %v72 = vld [vmem:[#allocation4] sm:$0xff]
    %v73 = vld [vmem:[#allocation4 + $0x8] sm:$0xff]
    %v74 = vld [vmem:[#allocation2] sm:$0x3]
    %vm75 = vcmask 523264
    %v76 = vsel %vm75, %v72, 0.0
    %v77 = vrot.slane %v76, 4
    %v78 = vadd.f32 %v76, %v77
    %v79 = vrot.slane %v78, 2
    %v80 = vadd.f32 %v78, %v79
    %v81 = vrot.slane %v80, 1
    %v82 = vadd.f32 %v80, %v81
    %v83 = vsel %vm75, %v73, 0.0
    %v84 = vrot.slane %v83, 4
    %v85 = vadd.f32 %v83, %v84
    %v86 = vrot.slane %v85, 2
    %v87 = vadd.f32 %v85, %v86
    %v88 = vrot.slane %v87, 1
    %v89 = vadd.f32 %v87, %v88
    %vm92 = vcmask 1041409
    %v93 = vsel %vm92, %v89, %v82
    %v95 = vadd.f32 %v74, %v93
    %vm96 = vcmask 517120
    %97 = vst.msk [vmem:[#allocation2] sm:$0x3] %vm96, %v95
    %v98 = vld [vmem:[#allocation3] sm:$0x3]
    %v99 = vsel %vm75, %v72, -inf
    %v100 = vrot.slane %v99, 4
    %v101 = vmax.f32 %v99, %v100
    %v102 = vrot.slane %v101, 2
    %v103 = vmax.f32 %v101, %v102
    %v104 = vrot.slane %v103, 1
    %v105 = vmax.f32 %v103, %v104
    %v106 = vsel %vm75, %v73, -inf
    %v107 = vrot.slane %v106, 4
    %v108 = vmax.f32 %v106, %v107
    %v109 = vrot.slane %v108, 2
    %v110 = vmax.f32 %v108, %v109
    %v111 = vrot.slane %v110, 1
    %v112 = vmax.f32 %v110, %v111
    %v115 = vsel %vm92, %v112, %v105
    %v117 = vmax.f32 %v98, %v115
    %118 = vst.msk [vmem:[#allocation3] sm:$0x3] %vm96, %v117
    // Predicated region
    $region34: #{tpu_custom_call.1} parent=1 // pred_check
      %p119 = pneg %p65
    $region35: #{tpu_custom_call.1} parent=1 // pred_check_branch
      %121 = sbr.rel (%p119) target = $region37
    $region36: #{tpu_custom_call.1} parent=1 // pred_region
      %v122 = vld [vmem:[#allocation2] sm:$0x3]
      %v123 = vmul.f32 %v122, 0.125
      %v124 = vld [vmem:[#allocation7] sm:$0xff]
      %v125 = vld [vmem:[#allocation7 + $0x8] sm:$0xff]
      %v126 = vld [vmem:[#allocation7 + $0x10] sm:$0xff]
      %v127 = vld [vmem:[#allocation7 + $0x18] sm:$0xff]
      %v128 = vld [vmem:[#allocation7 + $0x20] sm:$0xff]
      %v129 = vld [vmem:[#allocation7 + $0x28] sm:$0xff]
      %v130 = vld [vmem:[#allocation7 + $0x30] sm:$0xff]
      %v131 = vld [vmem:[#allocation7 + $0x38] sm:$0xff]
      %v132 = vld [vmem:[#allocation3] sm:$0x3]
      %v133 = vld [vmem:[#allocation9] sm:$0xff]
      %v134 = vld [vmem:[#allocation9 + $0x8] sm:$0xff]
      %v135 = vld [vmem:[#allocation9 + $0x10] sm:$0xff]
      %v136 = vld [vmem:[#allocation9 + $0x18] sm:$0xff]
      %v137 = vld [vmem:[#allocation9 + $0x20] sm:$0xff]
      %v138 = vld [vmem:[#allocation9 + $0x28] sm:$0xff]
      %v139 = vld [vmem:[#allocation9 + $0x30] sm:$0xff]
      %v140 = vld [vmem:[#allocation9 + $0x38] sm:$0xff]
      %v142 = vsel %vm75, %v132, 0
      %144 = vmatpush.msra.mxu0 0.0
      %145 = vmatpush.msra.mxu0 0.0
      %146 = vmatpush.msra.mxu0 0.0
      %147 = vmatpush.msra.mxu0 0.0
      %148 = vmatpush.msra.mxu0 0.0
      %149 = vmatpush.msra.mxu0 0.0
      %150 = vmatpush.msra.mxu0 0.0
      %151 = vmatpush.msra.mxu0 0.0
      %152 = vmatpush.msra.mxu0 %v140
      %153 = vmatpush.msra.mxu0 %v139
      %154 = vmatpush.msra.mxu0 %v138
      %155 = vmatpush.msra.mxu0 %v137
      %156 = vmatpush.msra.mxu0 %v136
      %157 = vmatpush.msra.mxu0 %v135
      %158 = vmatpush.msra.mxu0 %v134
      %159 = vmatpush.msra.mxu0 %v133
      %160 = vmatmul.f32.gmra.mxu0 %v142
      %v161 = vpop.f32.mrf.mxu0
      %v162 = vadd.f32 0.0, %v161
      %163 = vdwg.mxu0
      %v165 = vsel %vm75, %v123, 0
      %167 = vmatpush.msra.mxu0 0.0
      %168 = vmatpush.msra.mxu0 0.0
      %169 = vmatpush.msra.mxu0 0.0
      %170 = vmatpush.msra.mxu0 0.0
      %171 = vmatpush.msra.mxu0 0.0
      %172 = vmatpush.msra.mxu0 0.0
      %173 = vmatpush.msra.mxu0 0.0
      %174 = vmatpush.msra.mxu0 0.0
      %175 = vmatpush.msra.mxu0 %v131
      %176 = vmatpush.msra.mxu0 %v130
      %177 = vmatpush.msra.mxu0 %v129
      %178 = vmatpush.msra.mxu0 %v128
      %179 = vmatpush.msra.mxu0 %v127
      %180 = vmatpush.msra.mxu0 %v126
      %181 = vmatpush.msra.mxu0 %v125
      %182 = vmatpush.msra.mxu0 %v124
      %183 = vmatmul.f32.gmra.mxu0 %v165
      %v184 = vpop.f32.mrf.mxu0
      %v185 = vadd.f32 %v162, %v184
      %186 = vdwg.mxu0
      %v187 = vld [vmem:[%s3] sm:$0x1]
      %v189 = vperm.slane %v187, 0
      %v191 = vadd.f32 %v185, %v189
      %192 = vst [vmem:[#allocation10] sm:$0x3] %v191
    $region37: #{tpu_custom_call.1} parent=1 // pred_fallthru
      _
    // Predicated region
    $region38: #{tpu_custom_call.1} parent=1 // pred_check
      _
    $region39: #{tpu_custom_call.1} parent=1 // pred_check_branch
      %194 = sbr.rel (0) target = $region41
    $region40: #{tpu_custom_call.1} parent=1 // pred_region
      %196 = vsyncadd [#allocation6], 0
      %s198 = sshll.u32 [#allocation10], 4
      %s199 = int_to_ptr.vmem [resolvable:$true] %s198
      %s200 = sshll.u32 %s4, 4
      %s201 = int_to_ptr.hbm [resolvable:$true] %s200
      %203 = dma.vmem_to_hbm [thread:$0]  %s199, 32, %s201, [#allocation6]
    $region41: #{tpu_custom_call.1} parent=1 // pred_fallthru
      _
    // Predicated region
    $region42: #{tpu_custom_call.1} parent=1 // pred_check
      _
    $region43: #{tpu_custom_call.1} parent=1 // pred_check_branch
      %205 = sbr.rel (0) target = $region45
    $region44: #{tpu_custom_call.1} parent=1 // pred_region
      %207 = dma.done [#allocation6], 32
    $region45: #{tpu_custom_call.1} parent=1 // pred_fallthru
      _
    %208 = vsyncpa [#allocation5], 1
    %209 = vsyncpa [#allocation8], 1
    %210 = vsyncpa [#allocation6], 1

</llo_original>
